<compile_context>
chip_gen: v7x
topology: tpu7x:2x2x1
jax: 0.10.0
libtpu: 0.0.40
codegen_flags: <defaults>
</compile_context>

<pallas_src>
import functools

import numpy as np
import jax
import jax.numpy as jnp
from jax import lax
from jax.experimental import pallas as pl
from jax.experimental.pallas import tpu as pltpu

POOL_HW = 28
IN_PLANES = POOL_HW * POOL_HW  # 784
LANE = 128
SUBLANE = 8
CPAD = ((IN_PLANES + LANE - 1) // LANE) * LANE  # 896 = 7 * 128


def _round_up(x, m):
    return (x + m - 1) // m * m


def _adaptive_pool_matrix(in_size: int, out_size: int) -> jnp.ndarray:
    """Row-stochastic matrix reproducing torch AdaptiveAvgPool1d bin semantics."""
    p = np.zeros((out_size, in_size), dtype=np.float32)
    for i in range(out_size):
        start = (i * in_size) // out_size
        end = -(-((i + 1) * in_size) // out_size)  # ceil
        p[i, start:end] = 1.0 / (end - start)
    return jnp.asarray(p)


def _attention_kernel(pooled_ref, w1_ref, w2_ref, out_ref, *, k_valid, inv_temp):
    # pooled_ref: (TB, CPAD)  bf16
    # w1_ref:     (CPAD, HPAD) bf16   (resident across grid steps)
    # w2_ref:     (HPAD, KPAD) bf16   (resident across grid steps)
    # out_ref:    (TB, KPAD)  f32
    x = pooled_ref[...]

    # matmul 1 (1x1 conv #1) + ReLU, f32 accumulation on the MXU.
    h = jnp.dot(x, w1_ref[...], preferred_element_type=jnp.float32)
    h = jnp.maximum(h, 0.0).astype(jnp.bfloat16)

    # matmul 2 (1x1 conv #2), f32 accumulation.
    logits = jnp.dot(h, w2_ref[...], preferred_element_type=jnp.float32)
    logits = logits * inv_temp

    # Mask padded K lanes so they do not dilute the softmax (finite constant,
    # then explicit zeroing of the masked exponentials).
    col = lax.broadcasted_iota(jnp.int32, logits.shape, 1)
    valid = col < k_valid
    logits = jnp.where(valid, logits, jnp.float32(-1e30))

    # Numerically-stable softmax, all in f32, exact normalization.
    m = jnp.max(logits, axis=-1, keepdims=True)
    e = jnp.where(valid, jnp.exp(logits - m), jnp.float32(0.0))
    s = jnp.sum(e, axis=-1, keepdims=True)
    out_ref[...] = e / s


def attention_forward(x, w1, w2, *, temperature=30.0):
    """x: (B, 1, H, W) f32; w1: (hidden, 784) f32; w2: (K, hidden) f32."""
    B, C, H, W = x.shape
    assert C == 1, "Attention forward is only valid for C == 1 (reshape folds channels)"
    hidden, in_planes = w1.shape
    assert in_planes == IN_PLANES, "in_planes must equal 28*28 = 784"
    K = w2.shape[0]
    assert w2.shape[1] == hidden

    # ---- AdaptiveAvgPool2d((28, 28)) as two small matmuls (exact PyTorch bins). ----
    ph = _adaptive_pool_matrix(H, POOL_HW)  # (28, H)
    pw = _adaptive_pool_matrix(W, POOL_HW)  # (28, W)
    pooled = jnp.einsum("oh,bhw,pw->bop", ph, x[:, 0].astype(jnp.float32), pw)
    pooled = pooled.reshape(B, IN_PLANES)  # (B, 784) f32

    # ---- Padded, lane-dense, bf16 layouts for the kernel. ----
    HPAD = _round_up(max(hidden, LANE), LANE)
    KPAD = _round_up(max(K, LANE), LANE)
    TB = 256 if B > 256 else _round_up(max(B, SUBLANE), SUBLANE)
    B_pad = _round_up(B, TB)

    pooled_pad = jnp.pad(
        pooled.astype(jnp.bfloat16), ((0, B_pad - B), (0, CPAD - IN_PLANES))
    )
    w1t_pad = jnp.pad(
        w1.T.astype(jnp.bfloat16), ((0, CPAD - IN_PLANES), (0, HPAD - hidden))
    )
    w2t_pad = jnp.pad(
        w2.T.astype(jnp.bfloat16), ((0, HPAD - hidden), (0, KPAD - K))
    )

    kernel = functools.partial(
        _attention_kernel, k_valid=K, inv_temp=float(1.0 / temperature)
    )

    out_pad = pl.pallas_call(
        kernel,
        out_shape=jax.ShapeDtypeStruct((B_pad, KPAD), jnp.float32),
        grid_spec=pltpu.PrefetchScalarGridSpec(
            num_scalar_prefetch=0,
            grid=(B_pad // TB,),
            in_specs=[
                pl.BlockSpec((TB, CPAD), lambda i: (i, 0)),      # pooled batch tile
                pl.BlockSpec((CPAD, HPAD), lambda i: (0, 0)),    # W1^T, VMEM-resident
                pl.BlockSpec((HPAD, KPAD), lambda i: (0, 0)),    # W2^T, VMEM-resident
            ],
            out_specs=pl.BlockSpec((TB, KPAD), lambda i: (i, 0)),
        ),
        compiler_params=pltpu.CompilerParams(
            dimension_semantics=("parallel",),
        ),
    )(pooled_pad, w1t_pad, w2t_pad)

    return out_pad[:B, :K]


def _reference_forward(x, w1, w2, temperature):
    """Pure-JAX f32 reference mirroring the PyTorch module."""
    B = x.shape[0]
    ph = _adaptive_pool_matrix(x.shape[2], POOL_HW)
    pw = _adaptive_pool_matrix(x.shape[3], POOL_HW)
    pooled = jnp.einsum("oh,bhw,pw->bop", ph, x[:, 0].astype(jnp.float32), pw)
    pooled = pooled.reshape(B, IN_PLANES)
    h = jnp.maximum(pooled @ w1.T, 0.0)
    logits = (h @ w2.T) / temperature
    return jax.nn.softmax(logits, axis=-1)


if __name__ == "__main__":
    key = jax.random.PRNGKey(0)
    B, C, H, W = 4, 1, 56, 56          # H, W pooled down to 28x28
    ratio, K, temperature = 16, 4, 30.0
    hidden = IN_PLANES // ratio        # 49

    k_x, k_w1, k_w2 = jax.random.split(key, 3)
    x = jax.random.normal(k_x, (B, C, H, W), dtype=jnp.float32)
    # kaiming_normal_(mode='fan_out', nonlinearity='relu') on (out, in, 1, 1) convs.
    w1 = jax.random.normal(k_w1, (hidden, IN_PLANES), dtype=jnp.float32) * np.sqrt(2.0 / hidden)
    w2 = jax.random.normal(k_w2, (K, hidden), dtype=jnp.float32) * np.sqrt(2.0 / K)

    fwd = jax.jit(attention_forward, static_argnames="temperature")
    out = jax.block_until_ready(fwd(x, w1, w2, temperature=temperature))

    ref = _reference_forward(x, w1, w2, temperature)

    assert out.shape == (B, K), out.shape
    assert bool(jnp.all(jnp.isfinite(out)))
    assert bool(jnp.allclose(jnp.sum(out, axis=-1), 1.0, atol=1e-3))
    assert bool(jnp.allclose(out, ref, atol=2e-2)), float(jnp.max(jnp.abs(out - ref)))

    print("KERNEL_OK")
</pallas_src>

<mosaic_0001>
module attributes {stable_mosaic.version = 11 : i64} {
  func.func @_attention_kernel(%arg0: i32, %arg1: memref<8x896xbf16, #tpu.memory_space<vmem>>, %arg2: memref<896x128xbf16, #tpu.memory_space<vmem>>, %arg3: memref<128x128xbf16, #tpu.memory_space<vmem>>, %arg4: memref<8x128xf32, #tpu.memory_space<vmem>>) attributes {dimension_semantics = [#tpu.dimension_semantics<parallel>], iteration_bounds = array<i64: 1>, scalar_prefetch = 0 : i64, scratch_operands = 0 : i64, tpu.core_type = #tpu.core_type<tc>, window_params = [{transform_indices = @transform_0, window_bounds = array<i64: 8, 896>}, {pipeline_mode = #tpu.pipeline_mode<synchronous>, transform_indices = @transform_1, window_bounds = array<i64: 896, 128>}, {pipeline_mode = #tpu.pipeline_mode<synchronous>, transform_indices = @transform_2, window_bounds = array<i64: 128, 128>}, {transform_indices = @transform_3, window_bounds = array<i64: 8, 128>}]} {
    %c0 = arith.constant 0 : index
    %c0_0 = arith.constant 0 : index
    %0 = vector.load %arg1[%c0, %c0_0] : memref<8x896xbf16, #tpu.memory_space<vmem>>, vector<8x896xbf16>
    %c0_1 = arith.constant 0 : index
    %c0_2 = arith.constant 0 : index
    %1 = vector.load %arg2[%c0_1, %c0_2] : memref<896x128xbf16, #tpu.memory_space<vmem>>, vector<896x128xbf16>
    %cst = arith.constant dense<0.000000e+00> : vector<8x128xf32>
    %2 = tpu.matmul %0, %1, %cst {dimension_numbers = #tpu.dot_dimension_numbers<[1], [0], [0], [1], [0, 0, 1, 1], [], []>} : vector<8x896xbf16>, vector<896x128xbf16>, vector<8x128xf32> -> vector<8x128xf32>
    %cst_3 = arith.constant 0.000000e+00 : f32
    %3 = vector.broadcast %cst_3 : f32 to vector<8x128xf32>
    %4 = arith.maximumf %2, %3 : vector<8x128xf32>
    %5 = arith.truncf %4 : vector<8x128xf32> to vector<8x128xbf16>
    %c0_4 = arith.constant 0 : index
    %c0_5 = arith.constant 0 : index
    %6 = vector.load %arg3[%c0_4, %c0_5] : memref<128x128xbf16, #tpu.memory_space<vmem>>, vector<128x128xbf16>
    %cst_6 = arith.constant dense<0.000000e+00> : vector<8x128xf32>
    %7 = tpu.matmul %5, %6, %cst_6 {dimension_numbers = #tpu.dot_dimension_numbers<[1], [0], [0], [1], [0, 0, 1, 1], [], []>} : vector<8x128xbf16>, vector<128x128xbf16>, vector<8x128xf32> -> vector<8x128xf32>
    %cst_7 = arith.constant 0.0333333351 : f32
    %8 = vector.broadcast %cst_7 : f32 to vector<8x128xf32>
    %9 = arith.mulf %7, %8 : vector<8x128xf32>
    %10 = tpu.iota {dimensions = array<i32: 1>} : vector<8x128xi32>
    %c4_i32 = arith.constant 4 : i32
    %11 = vector.broadcast %c4_i32 : i32 to vector<8x128xi32>
    %12 = arith.cmpi slt, %10, %11 : vector<8x128xi32>
    %cst_8 = arith.constant -1.000000e+30 : f32
    %13 = vector.broadcast %cst_8 : f32 to vector<8x128xf32>
    %14 = arith.select %12, %9, %13 : vector<8x128xi1>, vector<8x128xf32>
    %cst_9 = arith.constant dense<0xFF800000> : vector<8xf32>
    %15 = vector.multi_reduction <maximumf>, %14, %cst_9 [1] : vector<8x128xf32> to vector<8xf32>
    %16 = vector.shape_cast %15 : vector<8xf32> to vector<8x1xf32>
    %17 = vector.broadcast %16 : vector<8x1xf32> to vector<8x128xf32>
    %18 = arith.subf %14, %17 : vector<8x128xf32>
    %19 = math.exp %18 : vector<8x128xf32>
    %cst_10 = arith.constant 0.000000e+00 : f32
    %20 = vector.broadcast %cst_10 : f32 to vector<8x128xf32>
    %21 = arith.select %12, %19, %20 : vector<8x128xi1>, vector<8x128xf32>
    %cst_11 = arith.constant dense<0.000000e+00> : vector<8xf32>
    %22 = vector.multi_reduction <add>, %21, %cst_11 [1] : vector<8x128xf32> to vector<8xf32>
    %23 = vector.shape_cast %22 : vector<8xf32> to vector<8x1xf32>
    %24 = vector.broadcast %23 : vector<8x1xf32> to vector<8x128xf32>
    %25 = arith.divf %21, %24 : vector<8x128xf32>
    %c0_12 = arith.constant 0 : index
    %c0_13 = arith.constant 0 : index
    %26 = vector.load %arg4[%c0_12, %c0_13] : memref<8x128xf32, #tpu.memory_space<vmem>>, vector<8x128xf32>
    tpu.vector_store %arg4[%c0_12, %c0_13], %25 {strides = array<i32>} : memref<8x128xf32, #tpu.memory_space<vmem>>, vector<8x128xf32>,
    return
  }
  func.func @transform_0(%arg0: i32) -> (i32, i32) {
    %c0_i32 = arith.constant 0 : i32
    %c0_i32_0 = arith.constant 0 : i32
    return %arg0, %c0_i32 : i32, i32
  }
  func.func @transform_1(%arg0: i32) -> (i32, i32) {
    %c0_i32 = arith.constant 0 : i32
    %c0_i32_0 = arith.constant 0 : i32
    %c0_i32_1 = arith.constant 0 : i32
    return %c0_i32, %c0_i32_0 : i32, i32
  }
  func.func @transform_2(%arg0: i32) -> (i32, i32) {
    %c0_i32 = arith.constant 0 : i32
    %c0_i32_0 = arith.constant 0 : i32
    %c0_i32_1 = arith.constant 0 : i32
    return %c0_i32, %c0_i32_0 : i32, i32
  }
  func.func @transform_3(%arg0: i32) -> (i32, i32) {
    %c0_i32 = arith.constant 0 : i32
    %c0_i32_0 = arith.constant 0 : i32
    return %arg0, %c0_i32 : i32, i32
  }
}

</mosaic_0001>

<llo_original>
// kernel: attention_forward.1
$region0: #{attention_forward.1}
  #allocation0 [shape = 'u32[]', space=smem, size = 0x4, offset = 0x4, fixed_abs, tag = 'smem constant byte address 0x4 - core index']
  #allocation1 [shape = 'u32[144,128]{1,0:T(1,128)}', space=vmem, size = 0x12000, scoped, tag = 'internal scratch']
  %s0 = inlined_call_operand.vmem [shape: bf16[8,896], index: 0, kind: input, shape index: {}]
  %s1 = inlined_call_operand.vmem [shape: bf16[896,128], index: 1, kind: input, shape index: {}]
  %s2 = inlined_call_operand.vmem [shape: bf16[128,128], index: 2, kind: input, shape index: {}]
  %s3 = inlined_call_operand.vmem [shape: f32[8,128], index: 3, kind: output, shape index: {}]
  %s4 = sld [smem:[#allocation0]]
  $region22: #{attention_forward.1} parent=0
    _
  %s6 = ssub.s32 1, %s4
  %s7 = scalar_select 0, %s6, %s4
  // Predicated region
  $region2: #{attention_forward.1} parent=0 // pred_check
    _
  $region3: #{attention_forward.1} parent=0 // pred_check_branch
    %9 = sbr.rel (0) target = $region5
  $region4: #{attention_forward.1} parent=0 // pred_region
    _
  $region5: #{attention_forward.1} parent=0 // pred_fallthru
    _
  // Predicated region
  $region6: #{attention_forward.1} parent=0 // pred_check
    _
  $region7: #{attention_forward.1} parent=0 // pred_check_branch
    %11 = sbr.rel (0) target = $region9
  $region8: #{attention_forward.1} parent=0 // pred_region
    _
  $region9: #{attention_forward.1} parent=0 // pred_fallthru
    _
  // Predicated region
  $region10: #{attention_forward.1} parent=0 // pred_check
    _
  $region11: #{attention_forward.1} parent=0 // pred_check_branch
    %13 = sbr.rel (0) target = $region13
  $region12: #{attention_forward.1} parent=0 // pred_region
    _
  $region13: #{attention_forward.1} parent=0 // pred_fallthru
    _
  %v15 = vld [vmem:[%s0] sm:$0xff]
  %v16 = vld [vmem:[%s0 + $0x8] sm:$0xff]
  %v17 = vld [vmem:[%s0 + $0x10] sm:$0xff]
  %v18 = vld [vmem:[%s0 + $0x18] sm:$0xf]
  %v19 = vld [vmem:[%s1] sm:$0xf]
  %v20 = vld [vmem:[%s1 + $0x4] sm:$0xf]
  %v21 = vld [vmem:[%s1 + $0x8] sm:$0xf]
  %v22 = vld [vmem:[%s1 + $0xc] sm:$0xf]
  %v23 = vld [vmem:[%s1 + $0x10] sm:$0xf]
  %v24 = vld [vmem:[%s1 + $0x14] sm:$0xf]
  %v25 = vld [vmem:[%s1 + $0x18] sm:$0xf]
  %v26 = vld [vmem:[%s1 + $0x1c] sm:$0xf]
  %v27 = vld [vmem:[%s1 + $0x20] sm:$0xf]
  %v28 = vld [vmem:[%s1 + $0x24] sm:$0xf]
  %v29 = vld [vmem:[%s1 + $0x28] sm:$0xf]
  %v30 = vld [vmem:[%s1 + $0x2c] sm:$0xf]
  %v31 = vld [vmem:[%s1 + $0x30] sm:$0xf]
  %v32 = vld [vmem:[%s1 + $0x34] sm:$0xf]
  %v33 = vld [vmem:[%s1 + $0x38] sm:$0xf]
  %v34 = vld [vmem:[%s1 + $0x3c] sm:$0xf]
  %v35 = vld [vmem:[%s1 + $0x40] sm:$0xf]
  %v36 = vld [vmem:[%s1 + $0x44] sm:$0xf]
  %v37 = vld [vmem:[%s1 + $0x48] sm:$0xf]
  %v38 = vld [vmem:[%s1 + $0x4c] sm:$0xf]
  %v39 = vld [vmem:[%s1 + $0x50] sm:$0xf]
  %v40 = vld [vmem:[%s1 + $0x54] sm:$0xf]
  %v41 = vld [vmem:[%s1 + $0x58] sm:$0xf]
  %v42 = vld [vmem:[%s1 + $0x5c] sm:$0xf]
  %v43 = vld [vmem:[%s1 + $0x60] sm:$0xf]
  %v44 = vld [vmem:[%s1 + $0x64] sm:$0xf]
  %v45 = vld [vmem:[%s1 + $0x68] sm:$0xf]
  %v46 = vld [vmem:[%s1 + $0x6c] sm:$0xf]
  %v47 = vld [vmem:[%s1 + $0x70] sm:$0xf]
  %v48 = vld [vmem:[%s1 + $0x74] sm:$0xf]
  %v49 = vld [vmem:[%s1 + $0x78] sm:$0xf]
  %v50 = vld [vmem:[%s1 + $0x7c] sm:$0xf]
  %v51 = vld [vmem:[%s1 + $0x80] sm:$0xf]
  %v52 = vld [vmem:[%s1 + $0x84] sm:$0xf]
  %v53 = vld [vmem:[%s1 + $0x88] sm:$0xf]
  %v54 = vld [vmem:[%s1 + $0x8c] sm:$0xf]
  %v55 = vld [vmem:[%s1 + $0x90] sm:$0xf]
  %v56 = vld [vmem:[%s1 + $0x94] sm:$0xf]
  %v57 = vld [vmem:[%s1 + $0x98] sm:$0xf]
  %v58 = vld [vmem:[%s1 + $0x9c] sm:$0xf]
  %v59 = vld [vmem:[%s1 + $0xa0] sm:$0xf]
  %v60 = vld [vmem:[%s1 + $0xa4] sm:$0xf]
  %v61 = vld [vmem:[%s1 + $0xa8] sm:$0xf]
  %v62 = vld [vmem:[%s1 + $0xac] sm:$0xf]
  %v63 = vld [vmem:[%s1 + $0xb0] sm:$0xf]
  %v64 = vld [vmem:[%s1 + $0xb4] sm:$0xf]
  %v65 = vld [vmem:[%s1 + $0xb8] sm:$0xf]
  %v66 = vld [vmem:[%s1 + $0xbc] sm:$0xf]
  %v67 = vld [vmem:[%s1 + $0xc0] sm:$0xf]
  %v68 = vld [vmem:[%s1 + $0xc4] sm:$0xf]
  %v69 = vld [vmem:[%s1 + $0xc8] sm:$0xf]
  %v70 = vld [vmem:[%s1 + $0xcc] sm:$0xf]
  %v71 = vld [vmem:[%s1 + $0xd0] sm:$0xf]
  %v72 = vld [vmem:[%s1 + $0xd4] sm:$0xf]
  %v73 = vld [vmem:[%s1 + $0xd8] sm:$0xf]
  %v74 = vld [vmem:[%s1 + $0xdc] sm:$0xf]
  %v75 = vld [vmem:[%s1 + $0xe0] sm:$0xf]
  %v76 = vld [vmem:[%s1 + $0xe4] sm:$0xf]
  %v77 = vld [vmem:[%s1 + $0xe8] sm:$0xf]
  %v78 = vld [vmem:[%s1 + $0xec] sm:$0xf]
  %v79 = vld [vmem:[%s1 + $0xf0] sm:$0xf]
  %v80 = vld [vmem:[%s1 + $0xf4] sm:$0xf]
  %v81 = vld [vmem:[%s1 + $0xf8] sm:$0xf]
  %v82 = vld [vmem:[%s1 + $0xfc] sm:$0xf]
  %v83 = vld [vmem:[%s1 + $0x100] sm:$0xf]
  %v84 = vld [vmem:[%s1 + $0x104] sm:$0xf]
  %v85 = vld [vmem:[%s1 + $0x108] sm:$0xf]
  %v86 = vld [vmem:[%s1 + $0x10c] sm:$0xf]
  %v87 = vld [vmem:[%s1 + $0x110] sm:$0xf]
  %v88 = vld [vmem:[%s1 + $0x114] sm:$0xf]
  %v89 = vld [vmem:[%s1 + $0x118] sm:$0xf]
  %v90 = vld [vmem:[%s1 + $0x11c] sm:$0xf]
  %v91 = vld [vmem:[%s1 + $0x120] sm:$0xf]
  %v92 = vld [vmem:[%s1 + $0x124] sm:$0xf]
  %v93 = vld [vmem:[%s1 + $0x128] sm:$0xf]
  %v94 = vld [vmem:[%s1 + $0x12c] sm:$0xf]
  %v95 = vld [vmem:[%s1 + $0x130] sm:$0xf]
  %v96 = vld [vmem:[%s1 + $0x134] sm:$0xf]
  %v97 = vld [vmem:[%s1 + $0x138] sm:$0xf]
  %v98 = vld [vmem:[%s1 + $0x13c] sm:$0xf]
  %v99 = vld [vmem:[%s1 + $0x140] sm:$0xf]
  %v100 = vld [vmem:[%s1 + $0x144] sm:$0xf]
  %v101 = vld [vmem:[%s1 + $0x148] sm:$0xf]
  %v102 = vld [vmem:[%s1 + $0x14c] sm:$0xf]
  %v103 = vld [vmem:[%s1 + $0x150] sm:$0xf]
  %v104 = vld [vmem:[%s1 + $0x154] sm:$0xf]
  %v105 = vld [vmem:[%s1 + $0x158] sm:$0xf]
  %v106 = vld [vmem:[%s1 + $0x15c] sm:$0xf]
  %v107 = vld [vmem:[%s1 + $0x160] sm:$0xf]
  %v108 = vld [vmem:[%s1 + $0x164] sm:$0xf]
  %v109 = vld [vmem:[%s1 + $0x168] sm:$0xf]
  %v110 = vld [vmem:[%s1 + $0x16c] sm:$0xf]
  %v111 = vld [vmem:[%s1 + $0x170] sm:$0xf]
  %v112 = vld [vmem:[%s1 + $0x174] sm:$0xf]
  %v113 = vld [vmem:[%s1 + $0x178] sm:$0xf]
  %v114 = vld [vmem:[%s1 + $0x17c] sm:$0xf]
  %v115 = vld [vmem:[%s1 + $0x180] sm:$0xf]
  %v116 = vld [vmem:[%s1 + $0x184] sm:$0xf]
  %v117 = vld [vmem:[%s1 + $0x188] sm:$0xf]
  %v118 = vld [vmem:[%s1 + $0x18c] sm:$0xf]
  %v119 = vld [vmem:[%s1 + $0x190] sm:$0xf]
  %v120 = vld [vmem:[%s1 + $0x194] sm:$0xf]
  %v121 = vld [vmem:[%s1 + $0x198] sm:$0xf]
  %v122 = vld [vmem:[%s1 + $0x19c] sm:$0xf]
  %v123 = vld [vmem:[%s1 + $0x1a0] sm:$0xf]
  %v124 = vld [vmem:[%s1 + $0x1a4] sm:$0xf]
  %v125 = vld [vmem:[%s1 + $0x1a8] sm:$0xf]
  %v126 = vld [vmem:[%s1 + $0x1ac] sm:$0xf]
  %v127 = vld [vmem:[%s1 + $0x1b0] sm:$0xf]
  %v128 = vld [vmem:[%s1 + $0x1b4] sm:$0xf]
  %v129 = vld [vmem:[%s1 + $0x1b8] sm:$0xf]
  %v130 = vld [vmem:[%s1 + $0x1bc] sm:$0xf]
  %v135 = vunpack.c.l.b16 %v15
  %v136 = vunpack.c.h.b16 %v15
  %v137 = vunpack.c.l.b16 %v16
  %v138 = vunpack.c.h.b16 %v16
  %v139 = vunpack.c.l.b16 %v17
  %v140 = vunpack.c.h.b16 %v17
  %v141 = vunpack.c.l.b16 %v18
  %v142 = vpack.c.b16 %v135, %v135
  %v143 = vpack.c.b16 %v136, %v136
  %v144 = vpack.c.b16 %v137, %v137
  %v145 = vpack.c.b16 %v138, %v138
  %v146 = vpack.c.b16 %v139, %v139
  %v147 = vpack.c.b16 %v140, %v140
  %v148 = vpack.c.b16 %v141, %v141
  %v268 = vunpack.c.l.b16 %v19
  %v269 = vunpack.c.l.b16 %v20
  %v270 = vunpack.c.l.b16 %v21
  %v271 = vunpack.c.l.b16 %v22
  %v272 = vunpack.c.l.b16 %v23
  %v273 = vunpack.c.l.b16 %v24
  %v274 = vunpack.c.l.b16 %v25
  %v275 = vunpack.c.l.b16 %v26
  %v276 = vunpack.c.l.b16 %v27
  %v277 = vunpack.c.l.b16 %v28
  %v278 = vunpack.c.l.b16 %v29
  %v279 = vunpack.c.l.b16 %v30
  %v280 = vunpack.c.l.b16 %v31
  %v281 = vunpack.c.l.b16 %v32
  %v282 = vunpack.c.l.b16 %v33
  %v283 = vunpack.c.l.b16 %v34
  %v284 = vunpack.c.l.b16 %v35
  %v285 = vunpack.c.l.b16 %v36
  %v286 = vunpack.c.l.b16 %v37
  %v287 = vunpack.c.l.b16 %v38
  %v288 = vunpack.c.l.b16 %v39
  %v289 = vunpack.c.l.b16 %v40
  %v290 = vunpack.c.l.b16 %v41
  %v291 = vunpack.c.l.b16 %v42
  %v292 = vunpack.c.l.b16 %v43
  %v293 = vunpack.c.l.b16 %v44
  %v294 = vunpack.c.l.b16 %v45
  %v295 = vunpack.c.l.b16 %v46
  %v296 = vunpack.c.l.b16 %v47
  %v297 = vunpack.c.l.b16 %v48
  %v298 = vunpack.c.l.b16 %v49
  %v299 = vunpack.c.l.b16 %v50
  %v300 = vunpack.c.l.b16 %v51
  %v301 = vunpack.c.l.b16 %v52
  %v302 = vunpack.c.l.b16 %v53
  %v303 = vunpack.c.l.b16 %v54
  %v304 = vunpack.c.l.b16 %v55
  %v305 = vunpack.c.l.b16 %v56
  %v306 = vunpack.c.l.b16 %v57
  %v307 = vunpack.c.l.b16 %v58
  %v308 = vunpack.c.l.b16 %v59
  %v309 = vunpack.c.l.b16 %v60
  %v310 = vunpack.c.l.b16 %v61
  %v311 = vunpack.c.l.b16 %v62
  %v312 = vunpack.c.l.b16 %v63
  %v313 = vunpack.c.l.b16 %v64
  %v314 = vunpack.c.l.b16 %v65
  %v315 = vunpack.c.l.b16 %v66
  %v316 = vunpack.c.l.b16 %v67
  %v317 = vunpack.c.l.b16 %v68
  %v318 = vunpack.c.l.b16 %v69
  %v319 = vunpack.c.l.b16 %v70
  %v320 = vunpack.c.l.b16 %v71
  %v321 = vunpack.c.l.b16 %v72
  %v322 = vunpack.c.l.b16 %v73
  %v323 = vunpack.c.l.b16 %v74
  %v324 = vunpack.c.l.b16 %v75
  %v325 = vunpack.c.l.b16 %v76
  %v326 = vunpack.c.l.b16 %v77
  %v327 = vunpack.c.l.b16 %v78
  %v328 = vunpack.c.l.b16 %v79
  %v329 = vunpack.c.l.b16 %v80
  %v330 = vunpack.c.l.b16 %v81
  %v331 = vunpack.c.l.b16 %v82
  %v332 = vunpack.c.l.b16 %v83
  %v333 = vunpack.c.l.b16 %v84
  %v334 = vunpack.c.l.b16 %v85
  %v335 = vunpack.c.l.b16 %v86
  %v336 = vunpack.c.l.b16 %v87
  %v337 = vunpack.c.l.b16 %v88
  %v338 = vunpack.c.l.b16 %v89
  %v339 = vunpack.c.l.b16 %v90
  %v340 = vunpack.c.l.b16 %v91
  %v341 = vunpack.c.l.b16 %v92
  %v342 = vunpack.c.l.b16 %v93
  %v343 = vunpack.c.l.b16 %v94
  %v344 = vunpack.c.l.b16 %v95
  %v345 = vunpack.c.l.b16 %v96
  %v346 = vunpack.c.l.b16 %v97
  %v347 = vunpack.c.l.b16 %v98
  %v348 = vunpack.c.l.b16 %v99
  %v349 = vunpack.c.l.b16 %v100
  %v350 = vunpack.c.l.b16 %v101
  %v351 = vunpack.c.l.b16 %v102
  %v352 = vunpack.c.l.b16 %v103
  %v353 = vunpack.c.l.b16 %v104
  %v354 = vunpack.c.l.b16 %v105
  %v355 = vunpack.c.l.b16 %v106
  %v356 = vunpack.c.l.b16 %v107
  %v357 = vunpack.c.l.b16 %v108
  %v358 = vunpack.c.l.b16 %v109
  %v359 = vunpack.c.l.b16 %v110
  %v360 = vunpack.c.l.b16 %v111
  %v361 = vunpack.c.l.b16 %v112
  %v362 = vunpack.c.l.b16 %v113
  %v363 = vunpack.c.l.b16 %v114
  %v364 = vunpack.c.l.b16 %v115
  %v365 = vunpack.c.l.b16 %v116
  %v366 = vunpack.c.l.b16 %v117
  %v367 = vunpack.c.l.b16 %v118
  %v368 = vunpack.c.l.b16 %v119
  %v369 = vunpack.c.l.b16 %v120
  %v370 = vunpack.c.l.b16 %v121
  %v371 = vunpack.c.l.b16 %v122
  %v372 = vunpack.c.l.b16 %v123
  %v373 = vunpack.c.l.b16 %v124
  %v374 = vunpack.c.l.b16 %v125
  %v375 = vunpack.c.l.b16 %v126
  %v376 = vunpack.c.l.b16 %v127
  %v377 = vunpack.c.l.b16 %v128
  %v378 = vunpack.c.l.b16 %v129
  %v379 = vunpack.c.l.b16 %v130
  %v380 = vpack.c.b16 %v269, %v268
  %v381 = vpack.c.b16 %v271, %v270
  %v382 = vpack.c.b16 %v273, %v272
  %v383 = vpack.c.b16 %v275, %v274
  %v384 = vpack.c.b16 %v277, %v276
  %v385 = vpack.c.b16 %v279, %v278
  %v386 = vpack.c.b16 %v281, %v280
  %v387 = vpack.c.b16 %v283, %v282
  %v388 = vpack.c.b16 %v285, %v284
  %v389 = vpack.c.b16 %v287, %v286
  %v390 = vpack.c.b16 %v289, %v288
  %v391 = vpack.c.b16 %v291, %v290
  %v392 = vpack.c.b16 %v293, %v292
  %v393 = vpack.c.b16 %v295, %v294
  %v394 = vpack.c.b16 %v297, %v296
  %v395 = vpack.c.b16 %v299, %v298
  %v396 = vpack.c.b16 %v301, %v300
  %v397 = vpack.c.b16 %v303, %v302
  %v398 = vpack.c.b16 %v305, %v304
  %v399 = vpack.c.b16 %v307, %v306
  %v400 = vpack.c.b16 %v309, %v308
  %v401 = vpack.c.b16 %v311, %v310
  %v402 = vpack.c.b16 %v313, %v312
  %v403 = vpack.c.b16 %v315, %v314
  %v404 = vpack.c.b16 %v317, %v316
  %v405 = vpack.c.b16 %v319, %v318
  %v406 = vpack.c.b16 %v321, %v320
  %v407 = vpack.c.b16 %v323, %v322
  %v408 = vpack.c.b16 %v325, %v324
  %v409 = vpack.c.b16 %v327, %v326
  %v410 = vpack.c.b16 %v329, %v328
  %v411 = vpack.c.b16 %v331, %v330
  %v412 = vpack.c.b16 %v333, %v332
  %v413 = vpack.c.b16 %v335, %v334
  %v414 = vpack.c.b16 %v337, %v336
  %v415 = vpack.c.b16 %v339, %v338
  %v416 = vpack.c.b16 %v341, %v340
  %v417 = vpack.c.b16 %v343, %v342
  %v418 = vpack.c.b16 %v345, %v344
  %v419 = vpack.c.b16 %v347, %v346
  %v420 = vpack.c.b16 %v349, %v348
  %v421 = vpack.c.b16 %v351, %v350
  %v422 = vpack.c.b16 %v353, %v352
  %v423 = vpack.c.b16 %v355, %v354
  %v424 = vpack.c.b16 %v357, %v356
  %v425 = vpack.c.b16 %v359, %v358
  %v426 = vpack.c.b16 %v361, %v360
  %v427 = vpack.c.b16 %v363, %v362
  %v428 = vpack.c.b16 %v365, %v364
  %v429 = vpack.c.b16 %v367, %v366
  %v430 = vpack.c.b16 %v369, %v368
  %v431 = vpack.c.b16 %v371, %v370
  %v432 = vpack.c.b16 %v373, %v372
  %v433 = vpack.c.b16 %v375, %v374
  %v434 = vpack.c.b16 %v377, %v376
  %v435 = vpack.c.b16 %v379, %v378
  %492 = vmatprep.subr.bf16.mxu0 0
  %493 = vmatpush1.bf16.msra.mxu0 %v380
  %494 = vmatprep.subr.bf16.mxu0 0
  %495 = vmatpush1.bf16.msra.mxu0 %v381
  %496 = vmatprep.subr.bf16.mxu0 0
  %497 = vmatpush1.bf16.msra.mxu0 %v382
  %498 = vmatprep.subr.bf16.mxu0 0
  %499 = vmatpush1.bf16.msra.mxu0 %v383
  %500 = vmatprep.subr.bf16.mxu0 0
  %501 = vmatpush1.bf16.msra.mxu0 %v384
  %502 = vmatprep.subr.bf16.mxu0 0
  %503 = vmatpush1.bf16.msra.mxu0 %v385
  %504 = vmatprep.subr.bf16.mxu0 0
  %505 = vmatpush1.bf16.msra.mxu0 %v386
  %506 = vmatprep.subr.bf16.mxu0 0
  %507 = vmatpush1.bf16.msra.mxu0 %v387
  %508 = vmatprep.subr.bf16.mxu0 0
  %509 = vmatpush1.bf16.msra.mxu0 %v388
  %510 = vmatprep.subr.bf16.mxu0 0
  %511 = vmatpush1.bf16.msra.mxu0 %v389
  %512 = vmatprep.subr.bf16.mxu0 0
  %513 = vmatpush1.bf16.msra.mxu0 %v390
  %514 = vmatprep.subr.bf16.mxu0 0
  %515 = vmatpush1.bf16.msra.mxu0 %v391
  %516 = vmatprep.subr.bf16.mxu0 0
  %517 = vmatpush1.bf16.msra.mxu0 %v392
  %518 = vmatprep.subr.bf16.mxu0 0
  %519 = vmatpush1.bf16.msra.mxu0 %v393
  %520 = vmatprep.subr.bf16.mxu0 0
  %521 = vmatpush1.bf16.msra.mxu0 %v394
  %522 = vmatprep.subr.bf16.mxu0 0
  %523 = vmatpush1.bf16.msra.mxu0 %v395
  %524 = vmatprep.mubr.bf16.mxu0 %v143
  %525 = vmatmul.mubr.bf16.gmra.mrb[0].mxu0 %v142
  %v526 = vpop.f32.mrb[0].mxu0
  %v527 = vadd.f32 0.0, %v526
  %v528 = vpop.f32.mrb[0].mxu0
  %v529 = vpop.f32.mrb[0].mxu0
  %v530 = vpop.f32.mrb[0].mxu0
  %531 = vdwg.mxu0
  %532 = vmatprep.subr.bf16.mxu0 0
  %533 = vmatpush1.bf16.msra.mxu0 %v396
  %534 = vmatprep.subr.bf16.mxu0 0
  %535 = vmatpush1.bf16.msra.mxu0 %v397
  %536 = vmatprep.subr.bf16.mxu0 0
  %537 = vmatpush1.bf16.msra.mxu0 %v398
  %538 = vmatprep.subr.bf16.mxu0 0
  %539 = vmatpush1.bf16.msra.mxu0 %v399
  %540 = vmatprep.subr.bf16.mxu0 0
  %541 = vmatpush1.bf16.msra.mxu0 %v400
  %542 = vmatprep.subr.bf16.mxu0 0
  %543 = vmatpush1.bf16.msra.mxu0 %v401
  %544 = vmatprep.subr.bf16.mxu0 0
  %545 = vmatpush1.bf16.msra.mxu0 %v402
  %546 = vmatprep.subr.bf16.mxu0 0
  %547 = vmatpush1.bf16.msra.mxu0 %v403
  %548 = vmatprep.subr.bf16.mxu0 0
  %549 = vmatpush1.bf16.msra.mxu0 %v404
  %550 = vmatprep.subr.bf16.mxu0 0
  %551 = vmatpush1.bf16.msra.mxu0 %v405
  %552 = vmatprep.subr.bf16.mxu0 0
  %553 = vmatpush1.bf16.msra.mxu0 %v406
  %554 = vmatprep.subr.bf16.mxu0 0
  %555 = vmatpush1.bf16.msra.mxu0 %v407
  %556 = vmatprep.subr.bf16.mxu0 0
  %557 = vmatpush1.bf16.msra.mxu0 %v408
  %558 = vmatprep.subr.bf16.mxu0 0
  %559 = vmatpush1.bf16.msra.mxu0 %v409
  %560 = vmatprep.subr.bf16.mxu0 0
  %561 = vmatpush1.bf16.msra.mxu0 %v410
  %562 = vmatprep.subr.bf16.mxu0 0
  %563 = vmatpush1.bf16.msra.mxu0 %v411
  %564 = vmatprep.mubr.bf16.mxu0 %v145
  %565 = vmatmul.mubr.bf16.gmra.mrb[0].mxu0 %v144
  %v566 = vpop.f32.mrb[0].mxu0
  %v567 = vadd.f32 %v527, %v566
  %v568 = vpop.f32.mrb[0].mxu0
  %v569 = vpop.f32.mrb[0].mxu0
  %v570 = vpop.f32.mrb[0].mxu0
  %571 = vdwg.mxu0
  %572 = vmatprep.subr.bf16.mxu0 0
  %573 = vmatpush1.bf16.msra.mxu0 %v412
  %574 = vmatprep.subr.bf16.mxu0 0
  %575 = vmatpush1.bf16.msra.mxu0 %v413
  %576 = vmatprep.subr.bf16.mxu0 0
  %577 = vmatpush1.bf16.msra.mxu0 %v414
  %578 = vmatprep.subr.bf16.mxu0 0
  %579 = vmatpush1.bf16.msra.mxu0 %v415
  %580 = vmatprep.subr.bf16.mxu0 0
  %581 = vmatpush1.bf16.msra.mxu0 %v416
  %582 = vmatprep.subr.bf16.mxu0 0
  %583 = vmatpush1.bf16.msra.mxu0 %v417
  %584 = vmatprep.subr.bf16.mxu0 0
  %585 = vmatpush1.bf16.msra.mxu0 %v418
  %586 = vmatprep.subr.bf16.mxu0 0
  %587 = vmatpush1.bf16.msra.mxu0 %v419
  %588 = vmatprep.subr.bf16.mxu0 0
  %589 = vmatpush1.bf16.msra.mxu0 %v420
  %590 = vmatprep.subr.bf16.mxu0 0
  %591 = vmatpush1.bf16.msra.mxu0 %v421
  %592 = vmatprep.subr.bf16.mxu0 0
  %593 = vmatpush1.bf16.msra.mxu0 %v422
  %594 = vmatprep.subr.bf16.mxu0 0
  %595 = vmatpush1.bf16.msra.mxu0 %v423
  %596 = vmatprep.subr.bf16.mxu0 0
  %597 = vmatpush1.bf16.msra.mxu0 %v424
  %598 = vmatprep.subr.bf16.mxu0 0
  %599 = vmatpush1.bf16.msra.mxu0 %v425
  %600 = vmatprep.subr.bf16.mxu0 0
  %601 = vmatpush1.bf16.msra.mxu0 %v426
  %602 = vmatprep.subr.bf16.mxu0 0
  %603 = vmatpush1.bf16.msra.mxu0 %v427
  %604 = vmatprep.mubr.bf16.mxu0 %v147
  %605 = vmatmul.mubr.bf16.gmra.mrb[0].mxu0 %v146
  %v606 = vpop.f32.mrb[0].mxu0
  %v607 = vadd.f32 %v567, %v606
  %v608 = vpop.f32.mrb[0].mxu0
  %v609 = vpop.f32.mrb[0].mxu0
  %v610 = vpop.f32.mrb[0].mxu0
  %611 = vdwg.mxu0
  %612 = vmatprep.subr.bf16.mxu0 0
  %613 = vmatpush1.bf16.msra.mxu0 %v428
  %614 = vmatprep.subr.bf16.mxu0 0
  %615 = vmatpush1.bf16.msra.mxu0 %v429
  %616 = vmatprep.subr.bf16.mxu0 0
  %617 = vmatpush1.bf16.msra.mxu0 %v430
  %618 = vmatprep.subr.bf16.mxu0 0
  %619 = vmatpush1.bf16.msra.mxu0 %v431
  %620 = vmatprep.subr.bf16.mxu0 0
  %621 = vmatpush1.bf16.msra.mxu0 %v432
  %622 = vmatprep.subr.bf16.mxu0 0
  %623 = vmatpush1.bf16.msra.mxu0 %v433
  %624 = vmatprep.subr.bf16.mxu0 0
  %625 = vmatpush1.bf16.msra.mxu0 %v434
  %626 = vmatprep.subr.bf16.mxu0 0
  %627 = vmatpush1.bf16.msra.mxu0 %v435
  %628 = vmatprep.subr.bf16.mxu0 0
  %629 = vmatpush1.bf16.msra.mxu0 0
  %630 = vmatprep.subr.bf16.mxu0 0
  %631 = vmatpush1.bf16.msra.mxu0 0
  %632 = vmatprep.subr.bf16.mxu0 0
  %633 = vmatpush1.bf16.msra.mxu0 0
  %634 = vmatprep.subr.bf16.mxu0 0
  %635 = vmatpush1.bf16.msra.mxu0 0
  %636 = vmatprep.subr.bf16.mxu0 0
  %637 = vmatpush1.bf16.msra.mxu0 0
  %638 = vmatprep.subr.bf16.mxu0 0
  %639 = vmatpush1.bf16.msra.mxu0 0
  %640 = vmatprep.subr.bf16.mxu0 0
  %641 = vmatpush1.bf16.msra.mxu0 0
  %642 = vmatprep.subr.bf16.mxu0 0
  %643 = vmatpush1.bf16.msra.mxu0 0
  %644 = vmatprep.mubr.bf16.mxu0 0
  %645 = vmatmul.mubr.bf16.gmra.mrb[0].mxu0 %v148
  %v646 = vpop.f32.mrb[0].mxu0
  %v647 = vadd.f32 %v607, %v646
  %v648 = vpop.f32.mrb[0].mxu0
  %v649 = vpop.f32.mrb[0].mxu0
  %v650 = vpop.f32.mrb[0].mxu0
  %651 = vdwg.mxu0
  %v652 = vmax.f32 %v647, 0.0
  %v653 = vpack.c.bf16 %v652, %v652
  %v654 = vld [vmem:[%s2] sm:$0xf]
  %v655 = vld [vmem:[%s2 + $0x4] sm:$0xf]
  %v656 = vld [vmem:[%s2 + $0x8] sm:$0xf]
  %v657 = vld [vmem:[%s2 + $0xc] sm:$0xf]
  %v658 = vld [vmem:[%s2 + $0x10] sm:$0xf]
  %v659 = vld [vmem:[%s2 + $0x14] sm:$0xf]
  %v660 = vld [vmem:[%s2 + $0x18] sm:$0xf]
  %v661 = vld [vmem:[%s2 + $0x1c] sm:$0xf]
  %v662 = vld [vmem:[%s2 + $0x20] sm:$0xf]
  %v663 = vld [vmem:[%s2 + $0x24] sm:$0xf]
  %v664 = vld [vmem:[%s2 + $0x28] sm:$0xf]
  %v665 = vld [vmem:[%s2 + $0x2c] sm:$0xf]
  %v666 = vld [vmem:[%s2 + $0x30] sm:$0xf]
  %v667 = vld [vmem:[%s2 + $0x34] sm:$0xf]
  %v668 = vld [vmem:[%s2 + $0x38] sm:$0xf]
  %v669 = vld [vmem:[%s2 + $0x3c] sm:$0xf]
  %v686 = vunpack.c.l.b16 %v654
  %v687 = vunpack.c.l.b16 %v655
  %v688 = vunpack.c.l.b16 %v656
  %v689 = vunpack.c.l.b16 %v657
  %v690 = vunpack.c.l.b16 %v658
  %v691 = vunpack.c.l.b16 %v659
  %v692 = vunpack.c.l.b16 %v660
  %v693 = vunpack.c.l.b16 %v661
  %v694 = vunpack.c.l.b16 %v662
  %v695 = vunpack.c.l.b16 %v663
  %v696 = vunpack.c.l.b16 %v664
  %v697 = vunpack.c.l.b16 %v665
  %v698 = vunpack.c.l.b16 %v666
  %v699 = vunpack.c.l.b16 %v667
  %v700 = vunpack.c.l.b16 %v668
  %v701 = vunpack.c.l.b16 %v669
  %v702 = vpack.c.b16 %v687, %v686
  %v703 = vpack.c.b16 %v689, %v688
  %v704 = vpack.c.b16 %v691, %v690
  %v705 = vpack.c.b16 %v693, %v692
  %v706 = vpack.c.b16 %v695, %v694
  %v707 = vpack.c.b16 %v697, %v696
  %v708 = vpack.c.b16 %v699, %v698
  %v709 = vpack.c.b16 %v701, %v700
  %718 = vmatprep.subr.bf16.mxu0 0
  %719 = vmatpush1.bf16.msra.mxu0 %v702
  %720 = vmatprep.subr.bf16.mxu0 0
  %721 = vmatpush1.bf16.msra.mxu0 %v703
  %722 = vmatprep.subr.bf16.mxu0 0
  %723 = vmatpush1.bf16.msra.mxu0 %v704
  %724 = vmatprep.subr.bf16.mxu0 0
  %725 = vmatpush1.bf16.msra.mxu0 %v705
  %726 = vmatprep.subr.bf16.mxu0 0
  %727 = vmatpush1.bf16.msra.mxu0 %v706
  %728 = vmatprep.subr.bf16.mxu0 0
  %729 = vmatpush1.bf16.msra.mxu0 %v707
  %730 = vmatprep.subr.bf16.mxu0 0
  %731 = vmatpush1.bf16.msra.mxu0 %v708
  %732 = vmatprep.subr.bf16.mxu0 0
  %733 = vmatpush1.bf16.msra.mxu0 %v709
  %734 = vmatprep.subr.bf16.mxu0 0
  %735 = vmatpush1.bf16.msra.mxu0 0
  %736 = vmatprep.subr.bf16.mxu0 0
  %737 = vmatpush1.bf16.msra.mxu0 0
  %738 = vmatprep.subr.bf16.mxu0 0
  %739 = vmatpush1.bf16.msra.mxu0 0
  %740 = vmatprep.subr.bf16.mxu0 0
  %741 = vmatpush1.bf16.msra.mxu0 0
  %742 = vmatprep.subr.bf16.mxu0 0
  %743 = vmatpush1.bf16.msra.mxu0 0
  %744 = vmatprep.subr.bf16.mxu0 0
  %745 = vmatpush1.bf16.msra.mxu0 0
  %746 = vmatprep.subr.bf16.mxu0 0
  %747 = vmatpush1.bf16.msra.mxu0 0
  %748 = vmatprep.subr.bf16.mxu0 0
  %749 = vmatpush1.bf16.msra.mxu0 0
  %750 = vmatprep.mubr.bf16.mxu0 0
  %751 = vmatmul.mubr.bf16.gmra.mrb[0].mxu0 %v653
  %v752 = vpop.f32.mrb[0].mxu0
  %v753 = vadd.f32 0.0, %v752
  %v754 = vpop.f32.mrb[0].mxu0
  %v755 = vpop.f32.mrb[0].mxu0
  %v756 = vpop.f32.mrb[0].mxu0
  %757 = vdwg.mxu0
  %v758 = vmul.f32 %v753, 0.033333335
  %v759 = vlaneseq
  %v760 = vand.u32 %v759, 127
  %vm761 = vcmp.lt.s32.totalorder %v760, 4
  %v762 = vsel %vm761, %v758, -1e+30
  %763 = vmax.xlane.f32.xlu0 %v762
  %v764 = vpop.xlane.xlu0 %763
  %v765 = vsub.f32 %v762, %v764
  %v766 = vmul.f32 %v765, 1.442695
  %v767 = vpow.pop %v766
  %v768 = vsel %vm761, %v767, 0.0
  %769 = vadd.xlane.f32.xlu0 %v768
  %v770 = vpop.xlane.xlu0 %769
  %v771 = vrcp.pop %v770
  %v772 = vmul.f32 %v768, %v771
  %773 = vst [vmem:[%s3] sm:$0xff] %v772
  // Predicated region
  $region14: #{attention_forward.1} parent=0 // pred_check
    _
  $region15: #{attention_forward.1} parent=0 // pred_check_branch
    %775 = sbr.rel (0) target = $region17
  $region16: #{attention_forward.1} parent=0 // pred_region
    _
  $region17: #{attention_forward.1} parent=0 // pred_fallthru
    _
  // Predicated region
  $region18: #{attention_forward.1} parent=0 // pred_check
    _
  $region19: #{attention_forward.1} parent=0 // pred_check_branch
    %777 = sbr.rel (0) target = $region21
  $region20: #{attention_forward.1} parent=0 // pred_region
    _
  $region21: #{attention_forward.1} parent=0 // pred_fallthru
    _

</llo_original>
